<compile_context>
chip_gen: v5e
topology: v5e:2x2
jax: 0.10.0
libtpu: 0.0.40
codegen_flags: <defaults>
</compile_context>

<pallas_src>
import functools

import jax
import jax.numpy as jnp
from jax.experimental import pallas as pl
from jax.experimental.pallas import tpu as pltpu


def _focal_loss_kernel(x_ref, t_ref, o_ref, *, gamma):
    """One (split, batch-block, spatial-block) grid step.

    x_ref: (B, C, 8, T) logits   -- spatial on (sublane, lane), classes looped
    t_ref: (B, 8, T)    int32 targets (-1 marks padded positions)
    o_ref: (1, 1, 8, T) f32 per-lane partial sums of picked focal values,
                        resident across the spatial ("arbitrary") grid axis.
    """
    j = pl.program_id(2)

    @pl.when(j == 0)
    def _():
        o_ref[...] = jnp.zeros_like(o_ref)

    x = x_ref[...].astype(jnp.float32)          # (B, C, 8, T)
    tg = t_ref[...]                             # (B, 8, T) int32
    num_classes = x.shape[1]

    # log-softmax pieces over the class axis.  Classes are a looped (non-vreg)
    # dim, so these reductions are C-1 elementwise VPU ops on full vregs.
    m = jnp.max(x, axis=1, keepdims=True)       # (B, 1, 8, T)
    shifted = x - m                             # (B, C, 8, T)
    denom = jnp.sum(jnp.exp(shifted), axis=1)   # (B, 8, T)   only C-wide EUP op

    # Gather the target class from `shifted` (the only C-wide select chain).
    picked = jnp.zeros(tg.shape, jnp.float32)   # (B, 8, T)
    for c in range(num_classes):
        picked = picked + jnp.where(tg == c, shifted[:, c], 0.0)

    log_p = picked - jnp.log(denom)             # picked log-softmax
    p = jnp.exp(log_p)                          # picked softmax == exp(log_p)

    one_minus_p = 1.0 - p
    g = float(gamma)
    if g == round(g) and 0 <= int(round(g)) <= 16:
        # Integer gamma: plain VPU multiplies, no pow / NaN hazard.
        w = jnp.ones_like(one_minus_p)
        for _ in range(int(round(g))):
            w = w * one_minus_p
    else:
        # General gamma: clamp guards against 1-p rounding slightly negative.
        w = jnp.power(jnp.maximum(one_minus_p, 0.0), g)

    contrib = w * log_p
    # Padded spatial positions (target == -1) contribute exactly 0.
    contrib = jnp.where(tg >= 0, contrib, 0.0)

    # Per-lane partial sums only -- the single cross-lane reduce, negate and
    # 1/total scale happen once in the wrapper epilogue.
    o_ref[...] += jnp.sum(contrib, axis=0)[None, None, :, :]


def _round_up(x, m):
    return ((x + m - 1) // m) * m


def _vmem_info():
    phys = 128 * 1024 * 1024
    try:
        phys = int(getattr(pltpu.get_tpu_info(), "vmem_capacity_bytes", phys))
    except Exception:
        pass
    if phys <= 64 * 1024 * 1024:          # v7x-class: 64 MiB physical VMEM
        budget = 12 * 1024 * 1024
    else:                                 # v5e / v6e: 128 MiB physical VMEM
        budget = 24 * 1024 * 1024
    return phys, budget


def _plan_tiles(N, C, HW, budget_bytes):
    """Returns (b_tile, t_lanes, n_spatial, n_split)."""
    # Bytes per lane column of one grid step (8 sublanes deep): double-buffered
    # logits + targets, the resident output block, plus headroom for the C-wide
    # temps the compute keeps live in VMEM.
    bytes_per_lane = 4 * 8 * (2 * (C + 1) + 2 + 3 * C)
    t_max = max(128, (budget_bytes // bytes_per_lane) // 128 * 128)

    l_need = -(-HW // 8)                  # lane extent after folding spatial to (8, L)
    if l_need <= t_max and not (N == 1 and l_need >= 256):
        n_spatial, n_split = 1, 1
        t = l_need                        # full-extent lane dim: no 128 alignment needed
    else:
        n_spatial = max(2, -(-l_need // t_max))
        if n_spatial % 2:
            n_spatial += 1                # keep it splittable across 2 TensorCores
        t = _round_up(-(-l_need // n_spatial), 128)
        n_split = 2

    # Small images: batch several images per grid step to amortize the
    # ~600-cycle per-step overhead (B_TILE must divide N).
    b_tile = 1
    if n_spatial == 1:
        while (b_tile * 2 <= N and N % (b_tile * 2) == 0
               and b_tile * 2 * t <= t_max):
            b_tile *= 2
    return b_tile, t, n_spatial, n_split


def focal_loss_2d(inputs_nchw, targets_nhw, gamma=2.0):
    """inputs_nchw: (N, C, H, W) float; targets_nhw: (N, H, W) int. Returns scalar."""
    N, C, H, W = inputs_nchw.shape
    HW = H * W
    total = N * HW

    phys_vmem, budget = _vmem_info()
    b_tile, t, n_spatial, n_split = _plan_tiles(N, C, HW, budget)
    L = n_spatial * t
    HW_pad = 8 * L
    nb = N // b_tile
    nsp = n_spatial // n_split

    # Free reshapes (contiguous splits only); padding only if the tile grid needs it.
    x = inputs_nchw.reshape(N, C, HW)
    tgt = targets_nhw.astype(jnp.int32).reshape(N, HW)
    if HW_pad != HW:
        x = jnp.pad(x, ((0, 0), (0, 0), (0, HW_pad - HW)))
        tgt = jnp.pad(tgt, ((0, 0), (0, HW_pad - HW)), constant_values=-1)
    x = x.reshape(N, C, 8, L)             # spatial folded onto (sublane, lane)
    tgt = tgt.reshape(N, 8, L)

    # Explicit, generation-aware VMEM limit: enough for the planned tiles,
    # never more than ~3/4 of this chip's physical VMEM.
    est = 4 * 8 * t * b_tile * (2 * (C + 1) + 2 + 3 * C)
    vmem_limit = int(min(phys_vmem * 3 // 4,
                         max(32 * 1024 * 1024, est + (8 << 20))))

    kernel = functools.partial(_focal_loss_kernel, gamma=float(gamma))

    partials = pl.pallas_call(
        kernel,
        out_shape=jax.ShapeDtypeStruct((n_split, nb, 8, t), jnp.float32),
        grid_spec=pltpu.PrefetchScalarGridSpec(
            num_scalar_prefetch=0,
            grid=(n_split, nb, nsp),
            in_specs=[
                # Logits: (B_TILE, C, 8, t) tile; spatial fills full vregs.
                pl.BlockSpec((b_tile, C, 8, t),
                             lambda s, b, j: (b, 0, 0, s * nsp + j)),
                # Targets: lane/sublane-dense int32 tiles.
                pl.BlockSpec((b_tile, 8, t),
                             lambda s, b, j: (b, 0, s * nsp + j)),
            ],
            # Per-(split, batch-block) partial-sum block, resident across the
            # spatial ("arbitrary") axis.
            out_specs=pl.BlockSpec((1, 1, 8, t),
                                   lambda s, b, j: (s, b, 0, 0)),
        ),
        compiler_params=pltpu.CompilerParams(
            dimension_semantics=("parallel", "parallel", "arbitrary"),
            vmem_limit_bytes=vmem_limit,
        ),
    )(x, tgt)

    # Tiny epilogue: one cross-lane reduce, negate, scale by precomputed 1/total.
    return -jnp.sum(partials) * (1.0 / float(total))


def _reference(inputs_nchw, targets_nhw, gamma=2.0):
    x = inputs_nchw.astype(jnp.float32)
    log_sm = jax.nn.log_softmax(x, axis=1)
    sm = jax.nn.softmax(x, axis=1)
    focal = (1.0 - sm) ** gamma * log_sm                      # (N, C, H, W)
    t = targets_nhw.astype(jnp.int32)
    picked = jnp.take_along_axis(focal, t[:, None, :, :], axis=1)[:, 0]
    return -jnp.mean(picked)


if __name__ == "__main__":
    # Note: FocalLoss2d.__init__(weight=None) -> no learnable parameters to init.
    N, C, H, W = 2, 4, 16, 16
    key = jax.random.PRNGKey(0)
    kx, kt = jax.random.split(key)
    inputs = jax.random.normal(kx, (N, C, H, W), dtype=jnp.float32)
    targets = jax.random.randint(kt, (N, H, W), 0, C, dtype=jnp.int32)

    loss_fn = jax.jit(lambda a, b: focal_loss_2d(a, b, gamma=2.0))
    loss = jax.block_until_ready(loss_fn(inputs, targets))

    ref = _reference(inputs, targets, gamma=2.0)
    assert jnp.allclose(loss, ref, atol=1e-5, rtol=1e-5), (loss, ref)

    print("KERNEL_OK")
</pallas_src>

<mosaic_0001>
module attributes {stable_mosaic.version = 11 : i64} {
  func.func @_focal_loss_kernel(%arg0: i32, %arg1: i32, %arg2: i32, %arg3: memref<2x4x8x32xf32, #tpu.memory_space<vmem>>, %arg4: memref<2x8x32xi32, #tpu.memory_space<vmem>>, %arg5: memref<1x1x8x32xf32, #tpu.memory_space<vmem>>) attributes {dimension_semantics = [#tpu.dimension_semantics<parallel>, #tpu.dimension_semantics<parallel>, #tpu.dimension_semantics<arbitrary>], iteration_bounds = array<i64: 1, 1, 1>, scalar_prefetch = 0 : i64, scratch_operands = 0 : i64, tpu.core_type = #tpu.core_type<tc>, window_params = [{transform_indices = @transform_0, window_bounds = array<i64: 2, 4, 8, 32>}, {transform_indices = @transform_1, window_bounds = array<i64: 2, 8, 32>}, {transform_indices = @transform_2, window_bounds = array<i64: 1, 1, 8, 32>}]} {
    %c0_i32 = arith.constant 0 : i32
    %0 = arith.cmpi eq, %arg2, %c0_i32 : i32
    %1 = arith.extui %0 : i1 to i32
    %c0_i32_0 = arith.constant 0 : i32
    %2 = arith.cmpi ne, %1, %c0_i32_0 : i32
    scf.if %2 {
      %cst_27 = arith.constant 0.000000e+00 : f32
      %58 = vector.broadcast %cst_27 : f32 to vector<1x1x8x32xf32>
      %c0_28 = arith.constant 0 : index
      %c0_29 = arith.constant 0 : index
      %c0_30 = arith.constant 0 : index
      %c0_31 = arith.constant 0 : index
      %59 = vector.load %arg5[%c0_28, %c0_29, %c0_30, %c0_31] : memref<1x1x8x32xf32, #tpu.memory_space<vmem>>, vector<1x1x8x32xf32>
      tpu.vector_store %arg5[%c0_28, %c0_29, %c0_30, %c0_31], %58 {strides = array<i32>} : memref<1x1x8x32xf32, #tpu.memory_space<vmem>>, vector<1x1x8x32xf32>,
    } else {
    }
    %c0 = arith.constant 0 : index
    %c0_1 = arith.constant 0 : index
    %c0_2 = arith.constant 0 : index
    %c0_3 = arith.constant 0 : index
    %3 = vector.load %arg3[%c0, %c0_1, %c0_2, %c0_3] : memref<2x4x8x32xf32, #tpu.memory_space<vmem>>, vector<2x4x8x32xf32>
    %c0_4 = arith.constant 0 : index
    %c0_5 = arith.constant 0 : index
    %c0_6 = arith.constant 0 : index
    %4 = vector.load %arg4[%c0_4, %c0_5, %c0_6] : memref<2x8x32xi32, #tpu.memory_space<vmem>>, vector<2x8x32xi32>
    %cst = arith.constant dense<0xFF800000> : vector<2x8x32xf32>
    %5 = vector.multi_reduction <maximumf>, %3, %cst [1] : vector<2x4x8x32xf32> to vector<2x8x32xf32>
    %6 = vector.shape_cast %5 : vector<2x8x32xf32> to vector<2x1x8x32xf32>
    %7 = vector.broadcast %6 : vector<2x1x8x32xf32> to vector<2x4x8x32xf32>
    %8 = arith.subf %3, %7 : vector<2x4x8x32xf32>
    %9 = math.exp %8 : vector<2x4x8x32xf32>
    %cst_7 = arith.constant dense<0.000000e+00> : vector<2x8x32xf32>
    %10 = vector.multi_reduction <add>, %9, %cst_7 [1] : vector<2x4x8x32xf32> to vector<2x8x32xf32>
    %cst_8 = arith.constant 0.000000e+00 : f32
    %11 = vector.broadcast %cst_8 : f32 to vector<2x8x32xf32>
    %c0_i32_9 = arith.constant 0 : i32
    %12 = vector.broadcast %c0_i32_9 : i32 to vector<2x8x32xi32>
    %13 = arith.cmpi eq, %4, %12 : vector<2x8x32xi32>
    %14 = vector.extract_strided_slice %8 {offsets = [0, 0, 0, 0], sizes = [2, 1, 8, 32], strides = [1, 1, 1, 1]} : vector<2x4x8x32xf32> to vector<2x1x8x32xf32>
    %15 = vector.shape_cast %14 : vector<2x1x8x32xf32> to vector<2x8x32xf32>
    %cst_10 = arith.constant 0.000000e+00 : f32
    %16 = vector.broadcast %cst_10 : f32 to vector<2x8x32xf32>
    %17 = arith.select %13, %15, %16 : vector<2x8x32xi1>, vector<2x8x32xf32>
    %18 = arith.addf %11, %17 : vector<2x8x32xf32>
    %c1_i32 = arith.constant 1 : i32
    %19 = vector.broadcast %c1_i32 : i32 to vector<2x8x32xi32>
    %20 = arith.cmpi eq, %4, %19 : vector<2x8x32xi32>
    %21 = vector.extract_strided_slice %8 {offsets = [0, 1, 0, 0], sizes = [2, 1, 8, 32], strides = [1, 1, 1, 1]} : vector<2x4x8x32xf32> to vector<2x1x8x32xf32>
    %22 = vector.shape_cast %21 : vector<2x1x8x32xf32> to vector<2x8x32xf32>
    %cst_11 = arith.constant 0.000000e+00 : f32
    %23 = vector.broadcast %cst_11 : f32 to vector<2x8x32xf32>
    %24 = arith.select %20, %22, %23 : vector<2x8x32xi1>, vector<2x8x32xf32>
    %25 = arith.addf %18, %24 : vector<2x8x32xf32>
    %c2_i32 = arith.constant 2 : i32
    %26 = vector.broadcast %c2_i32 : i32 to vector<2x8x32xi32>
    %27 = arith.cmpi eq, %4, %26 : vector<2x8x32xi32>
    %28 = vector.extract_strided_slice %8 {offsets = [0, 2, 0, 0], sizes = [2, 1, 8, 32], strides = [1, 1, 1, 1]} : vector<2x4x8x32xf32> to vector<2x1x8x32xf32>
    %29 = vector.shape_cast %28 : vector<2x1x8x32xf32> to vector<2x8x32xf32>
    %cst_12 = arith.constant 0.000000e+00 : f32
    %30 = vector.broadcast %cst_12 : f32 to vector<2x8x32xf32>
    %31 = arith.select %27, %29, %30 : vector<2x8x32xi1>, vector<2x8x32xf32>
    %32 = arith.addf %25, %31 : vector<2x8x32xf32>
    %c3_i32 = arith.constant 3 : i32
    %33 = vector.broadcast %c3_i32 : i32 to vector<2x8x32xi32>
    %34 = arith.cmpi eq, %4, %33 : vector<2x8x32xi32>
    %35 = vector.extract_strided_slice %8 {offsets = [0, 3, 0, 0], sizes = [2, 1, 8, 32], strides = [1, 1, 1, 1]} : vector<2x4x8x32xf32> to vector<2x1x8x32xf32>
    %36 = vector.shape_cast %35 : vector<2x1x8x32xf32> to vector<2x8x32xf32>
    %cst_13 = arith.constant 0.000000e+00 : f32
    %37 = vector.broadcast %cst_13 : f32 to vector<2x8x32xf32>
    %38 = arith.select %34, %36, %37 : vector<2x8x32xi1>, vector<2x8x32xf32>
    %39 = arith.addf %32, %38 : vector<2x8x32xf32>
    %40 = math.log %10 : vector<2x8x32xf32>
    %41 = arith.subf %39, %40 : vector<2x8x32xf32>
    %42 = math.exp %41 : vector<2x8x32xf32>
    %cst_14 = arith.constant 1.000000e+00 : f32
    %43 = vector.broadcast %cst_14 : f32 to vector<2x8x32xf32>
    %44 = arith.subf %43, %42 : vector<2x8x32xf32>
    %cst_15 = arith.constant 1.000000e+00 : f32
    %45 = vector.broadcast %cst_15 : f32 to vector<2x8x32xf32>
    %46 = arith.mulf %45, %44 : vector<2x8x32xf32>
    %47 = arith.mulf %46, %44 : vector<2x8x32xf32>
    %48 = arith.mulf %47, %41 : vector<2x8x32xf32>
    %c0_i32_16 = arith.constant 0 : i32
    %49 = vector.broadcast %c0_i32_16 : i32 to vector<2x8x32xi32>
    %50 = arith.cmpi sge, %4, %49 : vector<2x8x32xi32>
    %cst_17 = arith.constant 0.000000e+00 : f32
    %51 = vector.broadcast %cst_17 : f32 to vector<2x8x32xf32>
    %52 = arith.select %50, %48, %51 : vector<2x8x32xi1>, vector<2x8x32xf32>
    %c0_18 = arith.constant 0 : index
    %c0_19 = arith.constant 0 : index
    %c0_20 = arith.constant 0 : index
    %c0_21 = arith.constant 0 : index
    %53 = vector.load %arg5[%c0_18, %c0_19, %c0_20, %c0_21] : memref<1x1x8x32xf32, #tpu.memory_space<vmem>>, vector<1x1x8x32xf32>
    %cst_22 = arith.constant dense<0.000000e+00> : vector<8x32xf32>
    %54 = vector.multi_reduction <add>, %52, %cst_22 [0] : vector<2x8x32xf32> to vector<8x32xf32>
    %55 = vector.shape_cast %54 : vector<8x32xf32> to vector<1x1x8x32xf32>
    %56 = arith.addf %53, %55 : vector<1x1x8x32xf32>
    %c0_23 = arith.constant 0 : index
    %c0_24 = arith.constant 0 : index
    %c0_25 = arith.constant 0 : index
    %c0_26 = arith.constant 0 : index
    %57 = vector.load %arg5[%c0_23, %c0_24, %c0_25, %c0_26] : memref<1x1x8x32xf32, #tpu.memory_space<vmem>>, vector<1x1x8x32xf32>
    tpu.vector_store %arg5[%c0_23, %c0_24, %c0_25, %c0_26], %56 {strides = array<i32>} : memref<1x1x8x32xf32, #tpu.memory_space<vmem>>, vector<1x1x8x32xf32>,
    return
  }
  func.func @transform_0(%arg0: i32, %arg1: i32, %arg2: i32) -> (i32, i32, i32, i32) {
    %c1_i32 = arith.constant 1 : i32
    %0 = arith.muli %arg0, %c1_i32 : i32
    %1 = arith.addi %0, %arg2 : i32
    %c0_i32 = arith.constant 0 : i32
    %c0_i32_0 = arith.constant 0 : i32
    %c0_i32_1 = arith.constant 0 : i32
    return %arg1, %c0_i32, %c0_i32_0, %1 : i32, i32, i32, i32
  }
  func.func @transform_1(%arg0: i32, %arg1: i32, %arg2: i32) -> (i32, i32, i32) {
    %c1_i32 = arith.constant 1 : i32
    %0 = arith.muli %arg0, %c1_i32 : i32
    %1 = arith.addi %0, %arg2 : i32
    %c0_i32 = arith.constant 0 : i32
    %c0_i32_0 = arith.constant 0 : i32
    return %arg1, %c0_i32, %1 : i32, i32, i32
  }
  func.func @transform_2(%arg0: i32, %arg1: i32, %arg2: i32) -> (i32, i32, i32, i32) {
    %c0_i32 = arith.constant 0 : i32
    %c0_i32_0 = arith.constant 0 : i32
    %c0_i32_1 = arith.constant 0 : i32
    return %arg0, %arg1, %c0_i32, %c0_i32_0 : i32, i32, i32, i32
  }
}

</mosaic_0001>

<llo_original>
// kernel: _lambda_.1
$region0: #{_lambda_.1}
  #allocation0 [shape = 'u32[]', space=smem, size = 0x4, offset = 0x4, fixed_abs, tag = 'smem constant byte address 0x4 - core index']
  #allocation1 [shape = 'u32[72,128]{1,0:T(1,128)}', space=vmem, size = 0x9000, scoped, tag = 'internal scratch']
  %s0 = inlined_call_operand.vmem [shape: f32[2,4,8,32], index: 0, kind: input, shape index: {}]
  %s1 = inlined_call_operand.vmem [shape: s32[2,8,32], index: 1, kind: input, shape index: {}]
  %s2 = inlined_call_operand.vmem [shape: f32[1,1,8,32], index: 2, kind: output, shape index: {}]
  %s3 = sld [smem:[#allocation0]]
  $region22: #{_lambda_.1} parent=0
    _
  %s5 = ssub.s32 1, %s3
  %s6 = scalar_select 0, %s5, %s3
  // Predicated region
  $region2: #{_lambda_.1} parent=0 // pred_check
    _
  $region3: #{_lambda_.1} parent=0 // pred_check_branch
    %8 = sbr.rel (0) target = $region5
  $region4: #{_lambda_.1} parent=0 // pred_region
    %s9 = sadd.s32 0, 0
    %p10 = scmp.lt.s32.totalorder %s9, 0
    %s11 = scalar_select %p10, %s9, 0
    %s12 = smul.addr %s11, 8
    %s13 = scalar_lea.vmem %s0, %s12
    %s14 = sadd.s32 0, 0
  $region5: #{_lambda_.1} parent=0 // pred_fallthru
    _
  // Predicated region
  $region6: #{_lambda_.1} parent=0 // pred_check
    _
  $region7: #{_lambda_.1} parent=0 // pred_check_branch
    %16 = sbr.rel (0) target = $region9
  $region8: #{_lambda_.1} parent=0 // pred_region
    %s17 = sadd.s32 0, 0
    %p18 = scmp.lt.s32.totalorder %s17, 0
    %s19 = scalar_select %p18, %s17, 0
    %s20 = smul.addr %s19, 8
    %s21 = scalar_lea.vmem %s1, %s20
    %s22 = sadd.s32 0, 0
  $region9: #{_lambda_.1} parent=0 // pred_fallthru
    _
  %s23 = sadd.s32 0, 0
  %p24 = scmp.lt.s32.totalorder %s23, 0
  %s25 = scalar_select %p24, %s23, 0
  %s26 = smul.addr %s25, 8
  %s27 = scalar_lea.vmem %s0, %s26
  %s28 = sadd.s32 0, 0
  %p29 = scmp.lt.s32.totalorder %s28, 0
  %s30 = scalar_select %p29, %s28, 0
  %s31 = smul.addr %s30, 8
  %s32 = scalar_lea.vmem %s1, %s31
  %s33 = sadd.s32 0, 0
  %p34 = scmp.lt.s32.totalorder %s33, 0
  %s35 = scalar_select %p34, %s33, 0
  %s36 = smul.addr %s35, 8
  %s37 = scalar_lea.vmem %s0, %s36
  %s38 = sadd.s32 0, 0
  %s39 = sadd.s32 0, 0
  %p40 = scmp.lt.s32.totalorder %s39, 0
  %s41 = scalar_select %p40, %s39, 0
  %s42 = smul.addr %s41, 8
  %s43 = scalar_lea.vmem %s1, %s42
  %s44 = sadd.s32 0, 0
  %p45 = scmp.eq.s32.totalorder 0, 0
  // Predicated region
  $region10: #{_lambda_.1} parent=0 // pred_check
    %p46 = pneg %p45
  $region11: #{_lambda_.1} parent=0 // pred_check_branch
    %48 = sbr.rel (%p46) target = $region13
  $region12: #{_lambda_.1} parent=0 // pred_region
    %vm49 = vcmask 261120
    %50 = vst.msk [vmem:[%s2] sm:$0xff] %vm49, 0.0
  $region13: #{_lambda_.1} parent=0 // pred_fallthru
    _
  %v51 = vld [vmem:[%s37] sm:$0xff]
  %v52 = vld [vmem:[%s37 + $0x8] sm:$0xff]
  %v53 = vld [vmem:[%s37 + $0x10] sm:$0xff]
  %v54 = vld [vmem:[%s37 + $0x18] sm:$0xff]
  %v55 = vld [vmem:[%s37 + $0x20] sm:$0xff]
  %v56 = vld [vmem:[%s37 + $0x28] sm:$0xff]
  %v57 = vld [vmem:[%s37 + $0x30] sm:$0xff]
  %v58 = vld [vmem:[%s37 + $0x38] sm:$0xff]
  %v59 = vld [vmem:[%s43] sm:$0xff]
  %v60 = vld [vmem:[%s43 + $0x8] sm:$0xff]
  %vm61 = vcmask 261120
  %v62 = vsel %vm61, %v51, -inf
  %v63 = vsel %vm61, %v52, -inf
  %v64 = vsel %vm61, %v53, -inf
  %v65 = vmax.f32 %v62, %v64
  %v66 = vsel %vm61, %v54, -inf
  %v67 = vmax.f32 %v63, %v66
  %v68 = vmax.f32 %v65, %v67
  %v69 = vsel %vm61, %v55, -inf
  %v70 = vsel %vm61, %v56, -inf
  %v71 = vsel %vm61, %v57, -inf
  %v72 = vmax.f32 %v69, %v71
  %v73 = vsel %vm61, %v58, -inf
  %v74 = vmax.f32 %v70, %v73
  %v75 = vmax.f32 %v72, %v74
  %v76 = vsub.f32 %v51, %v68
  %v77 = vsub.f32 %v52, %v68
  %v78 = vsub.f32 %v53, %v68
  %v79 = vsub.f32 %v54, %v68
  %v80 = vsub.f32 %v55, %v75
  %v81 = vsub.f32 %v56, %v75
  %v82 = vsub.f32 %v57, %v75
  %v83 = vsub.f32 %v58, %v75
  %v84 = vmul.f32 %v76, 1.442695
  %v85 = vpow.pop %v84
  %v86 = vmul.f32 %v77, 1.442695
  %v87 = vpow.pop %v86
  %v88 = vmul.f32 %v78, 1.442695
  %v89 = vpow.pop %v88
  %v90 = vmul.f32 %v79, 1.442695
  %v91 = vpow.pop %v90
  %v92 = vmul.f32 %v80, 1.442695
  %v93 = vpow.pop %v92
  %v94 = vmul.f32 %v81, 1.442695
  %v95 = vpow.pop %v94
  %v96 = vmul.f32 %v82, 1.442695
  %v97 = vpow.pop %v96
  %v98 = vmul.f32 %v83, 1.442695
  %v99 = vpow.pop %v98
  %v100 = vsel %vm61, %v85, 0.0
  %v101 = vsel %vm61, %v87, 0.0
  %v102 = vadd.f32 %v100, %v101
  %v103 = vsel %vm61, %v89, 0.0
  %v104 = vadd.f32 %v102, %v103
  %v105 = vsel %vm61, %v91, 0.0
  %v106 = vadd.f32 %v104, %v105
  %v107 = vsel %vm61, %v93, 0.0
  %v108 = vsel %vm61, %v95, 0.0
  %v109 = vadd.f32 %v107, %v108
  %v110 = vsel %vm61, %v97, 0.0
  %v111 = vadd.f32 %v109, %v110
  %v112 = vsel %vm61, %v99, 0.0
  %v113 = vadd.f32 %v111, %v112
  %vm114 = vcmp.eq.s32.totalorder %v59, 0
  %vm115 = vcmp.eq.s32.totalorder %v60, 0
  %v116 = vsel %vm114, %v76, 0.0
  %v117 = vsel %vm115, %v80, 0.0
  %v118 = vadd.f32 %v116, 0.0
  %v119 = vadd.f32 %v117, 0.0
  %vm120 = vcmp.eq.s32.totalorder %v59, 1
  %vm121 = vcmp.eq.s32.totalorder %v60, 1
  %v122 = vsel %vm120, %v77, 0.0
  %v123 = vsel %vm121, %v81, 0.0
  %v124 = vadd.f32 %v118, %v122
  %v125 = vadd.f32 %v119, %v123
  %vm126 = vcmp.eq.s32.totalorder %v59, 2
  %vm127 = vcmp.eq.s32.totalorder %v60, 2
  %v128 = vsel %vm126, %v78, 0.0
  %v129 = vsel %vm127, %v82, 0.0
  %v130 = vadd.f32 %v124, %v128
  %v131 = vadd.f32 %v125, %v129
  %vm132 = vcmp.eq.s32.totalorder %v59, 3
  %vm133 = vcmp.eq.s32.totalorder %v60, 3
  %v134 = vsel %vm132, %v79, 0.0
  %v135 = vsel %vm133, %v83, 0.0
  %v136 = vadd.f32 %v130, %v134
  %v137 = vadd.f32 %v131, %v135
  %v138 = vlog2.pop %v106
  %v139 = vmul.f32 %v138, 0.6931472
  %v140 = vlog2.pop %v113
  %v141 = vmul.f32 %v140, 0.6931472
  %v142 = vsub.f32 %v136, %v139
  %v143 = vsub.f32 %v137, %v141
  %v144 = vmul.f32 %v142, 1.442695
  %v145 = vpow.pop %v144
  %v146 = vmul.f32 %v143, 1.442695
  %v147 = vpow.pop %v146
  %v148 = vsub.f32 1.0, %v145
  %v149 = vsub.f32 1.0, %v147
  %v150 = vmul.f32 %v148, %v148
  %v151 = vmul.f32 %v149, %v149
  %v152 = vmul.f32 %v150, %v142
  %v153 = vmul.f32 %v151, %v143
  %vm154 = vcmp.ge.s32.totalorder %v59, 0
  %vm155 = vcmp.ge.s32.totalorder %v60, 0
  %v156 = vsel %vm154, %v152, 0.0
  %v157 = vsel %vm155, %v153, 0.0
  %v158 = vld [vmem:[%s2] sm:$0xff]
  %v159 = vsel %vm61, %v156, 0.0
  %v160 = vsel %vm61, %v157, 0.0
  %v161 = vadd.f32 %v159, %v160
  %v162 = vadd.f32 %v158, %v161
  %163 = vst.msk [vmem:[%s2] sm:$0xff] %vm61, %v162
  // Predicated region
  $region14: #{_lambda_.1} parent=0 // pred_check
    _
  $region15: #{_lambda_.1} parent=0 // pred_check_branch
    %165 = sbr.rel (0) target = $region17
  $region16: #{_lambda_.1} parent=0 // pred_region
    _
  $region17: #{_lambda_.1} parent=0 // pred_fallthru
    _
  // Predicated region
  $region18: #{_lambda_.1} parent=0 // pred_check
    _
  $region19: #{_lambda_.1} parent=0 // pred_check_branch
    %167 = sbr.rel (0) target = $region21
  $region20: #{_lambda_.1} parent=0 // pred_region
    _
  $region21: #{_lambda_.1} parent=0 // pred_fallthru
    _

</llo_original>
